<compile_context>
chip_gen: v5e
topology: v5e:2x2
jax: 0.10.0
libtpu: 0.0.40
codegen_flags: <defaults>
</compile_context>

<pallas_src>
import functools

import jax
import jax.numpy as jnp
from jax.experimental import pallas as pl
from jax.experimental.pallas import tpu as pltpu

_LANES = 128
_SUBLANES = 8
_SMALL_ELEMS = 64 * 1024  # below this, plain XLA wins (launch/epilogue overhead)


def _round_up(x: int, m: int) -> int:
    return ((x + m - 1) // m) * m


def _round_down(x: int, m: int) -> int:
    return (x // m) * m


def _tile_bytes_target() -> int:
    """Per-input, per-pipeline-buffer tile size (bytes), per TPU generation."""
    try:
        info = pltpu.get_tpu_info()
        vmem = getattr(info, "vmem_capacity_bytes", None)
        # v7x (64 MiB VMEM / ~3.2 TB/s HBM per TC): bigger tiles amortize the
        # fixed per-grid-step overhead.  2 inputs x 2 buffers x 4 MiB = 16 MiB,
        # comfortably under the 32 MiB scoped-VMEM default.
        if vmem is not None and vmem <= 64 * 1024 * 1024:
            return 4 * 1024 * 1024
    except Exception:
        pass
    # v5e/v6e: 2 inputs x 2 buffers x 2 MiB = 8 MiB fits even v5e's ~16 MiB
    # scoped default; 2 MiB tiles are already at the measured v6e HBM plateau.
    return 2 * 1024 * 1024


def _l2_loss_kernel(g_ref, x_ref, out_ref, acc_ref, *, b_rows, t, tr, needs_mask):
    c = pl.program_id(0)  # core / outer ("parallel") axis
    i = pl.program_id(1)  # row-tile stream ("arbitrary" reduction axis)

    @pl.when(i == 0)
    def _init():
        acc_ref[...] = jnp.zeros_like(acc_ref)

    diff = g_ref[...].astype(jnp.float32) - x_ref[...].astype(jnp.float32)
    sq = diff * diff
    if needs_mask:
        # Partial / duplicated edge blocks: zero rows beyond the real batch.
        row0 = (c * t + i) * tr
        row_ids = row0 + jax.lax.broadcasted_iota(jnp.int32, (tr, 1), 0)
        sq = jnp.where(row_ids < b_rows, sq, 0.0)

    # Fold sublane groups into the small (8, d) accumulator: VPU adds across
    # vregs only; the single XLU reduction is deferred to the finalize branch.
    acc_ref[...] += jnp.sum(sq.reshape(tr // _SUBLANES, _SUBLANES, -1), axis=0)

    @pl.when(i == pl.num_programs(1) - 1)
    def _finalize():
        out_ref[...] = jnp.sum(acc_ref[...], axis=0, keepdims=True).reshape(1, 1, -1)


def my_l2_loss(g: jax.Array, logits: jax.Array, *, force_pallas: bool = False,
               tile_bytes: int | None = None) -> jax.Array:
    """Pallas-TPU implementation of MyL2Loss.forward. Returns a scalar f32."""
    assert g.shape == logits.shape and g.ndim == 2, "expected [b, d] inputs"
    b, d = g.shape
    n = b * d

    itemsize = max(jnp.dtype(g.dtype).itemsize, jnp.dtype(logits.dtype).itemsize)
    min_itemsize = min(jnp.dtype(g.dtype).itemsize, jnp.dtype(logits.dtype).itemsize)
    sub = max(_SUBLANES, 32 // min_itemsize)  # 8 for f32, 16 for bf16, 32 for int8/fp8
    d_lanes = _round_up(d, _LANES)
    tile_target = tile_bytes if tile_bytes is not None else _tile_bytes_target()

    # Small inputs, or rows so wide that a single sublane-group of rows blows the
    # VMEM budget: one fused XLA reduction is the better tool.
    if not force_pallas and (
        n <= _SMALL_ELEMS or sub * d_lanes * itemsize > 8 * 1024 * 1024
    ):
        diff = g.astype(jnp.float32) - logits.astype(jnp.float32)
        return jnp.sum(diff * diff) / jnp.float32(b)

    # ---- row tiling: no padding, no re-layout of the inputs -----------------
    per_row_bytes = d_lanes * itemsize
    tr = max(sub, _round_down(tile_target // per_row_bytes, sub))
    tr = min(tr, _round_up(b, sub))
    num_tiles = pl.cdiv(b, tr)            # last real tile always has >= 1 valid row

    nc = 2 if num_tiles >= 2 else 1       # megacore split (v7x); serial loop elsewhere
    t = pl.cdiv(num_tiles, nc)
    needs_mask = (nc * t * tr) != b
    max_block = num_tiles - 1

    def in_map(c, i):
        # Clamp so over-shooting blocks (odd tile counts / partial last tile)
        # DMA in-bounds data; their rows are zeroed by the in-kernel mask.
        return (jnp.minimum(c * t + i, max_block), 0)

    kernel = functools.partial(
        _l2_loss_kernel, b_rows=b, t=t, tr=tr, needs_mask=needs_mask)

    partials = pl.pallas_call(
        kernel,
        out_shape=jax.ShapeDtypeStruct((nc, 1, d), jnp.float32),
        grid=(nc, t),
        in_specs=[
            pl.BlockSpec((tr, d), in_map),
            pl.BlockSpec((tr, d), in_map),
        ],
        out_specs=pl.BlockSpec((1, 1, d), lambda c, i: (c, 0, 0)),
        scratch_shapes=[pltpu.VMEM((_SUBLANES, d), jnp.float32)],
        compiler_params=pltpu.CompilerParams(
            dimension_semantics=("parallel", "arbitrary"),
        ),
    )(g, logits)

    # Tiny epilogue: sum the per-core (1, d) partial rows, divide by batch.
    return jnp.sum(partials) / jnp.float32(b)


def _reference(g, logits):
    diff = g.astype(jnp.float32) - logits.astype(jnp.float32)
    return jnp.sum(diff * diff, axis=1).mean()


if __name__ == "__main__":
    key = jax.random.PRNGKey(0)

    cases = [
        # (b, d, dtype, tile_bytes, tol)
        (8, 32, jnp.float32, None, 1e-5),     # aligned, single tile
        (37, 33, jnp.float32, 4096, 1e-5),    # ragged rows: edge-block mask + 2-way split + clamped map
        (16, 384, jnp.bfloat16, None, 1e-2),  # bf16 inputs (16-row sublane tiles), f32 accumulation
    ]
    for idx, (b, d, dtype, tb, tol) in enumerate(cases):
        kg, kx, key = jax.random.split(key, 3)
        g = jax.random.normal(kg, (b, d), dtype=jnp.float32).astype(dtype)
        x = jax.random.normal(kx, (b, d), dtype=jnp.float32).astype(dtype)
        out = jax.block_until_ready(my_l2_loss(g, x, force_pallas=True, tile_bytes=tb))
        ref = _reference(g, x)
        assert jnp.allclose(out, ref, rtol=tol, atol=tol), (idx, out, ref)

    # Small-input fallback path (pure XLA), same semantics.
    kg, kx, key = jax.random.split(key, 3)
    g = jax.random.normal(kg, (8, 32), dtype=jnp.float32)
    x = jax.random.normal(kx, (8, 32), dtype=jnp.float32)
    out = jax.block_until_ready(my_l2_loss(g, x))
    assert jnp.allclose(out, _reference(g, x), rtol=1e-5, atol=1e-5), (out, _reference(g, x))

    print("KERNEL_OK")
</pallas_src>

<mosaic_0001>
module attributes {stable_mosaic.version = 11 : i64} {
  func.func @_l2_loss_kernel(%arg0: i32, %arg1: i32, %arg2: memref<8x32xf32, #tpu.memory_space<vmem>>, %arg3: memref<8x32xf32, #tpu.memory_space<vmem>>, %arg4: memref<1x1x32xf32, #tpu.memory_space<vmem>>, %arg5: memref<8x32xf32, #tpu.memory_space<vmem>>) attributes {dimension_semantics = [#tpu.dimension_semantics<parallel>, #tpu.dimension_semantics<arbitrary>], iteration_bounds = array<i64: 1, 1>, scalar_prefetch = 0 : i64, scratch_operands = 1 : i64, tpu.core_type = #tpu.core_type<tc>, window_params = [{transform_indices = @transform_0, window_bounds = array<i64: 8, 32>}, {transform_indices = @transform_1, window_bounds = array<i64: 8, 32>}, {transform_indices = @transform_2, window_bounds = array<i64: 1, 1, 32>}]} {
    %c0_i32 = arith.constant 0 : i32
    %0 = arith.cmpi eq, %arg1, %c0_i32 : i32
    %1 = arith.extui %0 : i1 to i32
    %c0_i32_0 = arith.constant 0 : i32
    %2 = arith.cmpi ne, %1, %c0_i32_0 : i32
    scf.if %2 {
      %cst_10 = arith.constant 0.000000e+00 : f32
      %15 = vector.broadcast %cst_10 : f32 to vector<8x32xf32>
      %c0_11 = arith.constant 0 : index
      %c0_12 = arith.constant 0 : index
      %16 = vector.load %arg5[%c0_11, %c0_12] : memref<8x32xf32, #tpu.memory_space<vmem>>, vector<8x32xf32>
      tpu.vector_store %arg5[%c0_11, %c0_12], %15 {strides = array<i32>} : memref<8x32xf32, #tpu.memory_space<vmem>>, vector<8x32xf32>,
    } else {
    }
    %c0 = arith.constant 0 : index
    %c0_1 = arith.constant 0 : index
    %3 = vector.load %arg2[%c0, %c0_1] : memref<8x32xf32, #tpu.memory_space<vmem>>, vector<8x32xf32>
    %c0_2 = arith.constant 0 : index
    %c0_3 = arith.constant 0 : index
    %4 = vector.load %arg3[%c0_2, %c0_3] : memref<8x32xf32, #tpu.memory_space<vmem>>, vector<8x32xf32>
    %5 = arith.subf %3, %4 : vector<8x32xf32>
    %6 = arith.mulf %5, %5 : vector<8x32xf32>
    %c0_4 = arith.constant 0 : index
    %c0_5 = arith.constant 0 : index
    %7 = vector.load %arg5[%c0_4, %c0_5] : memref<8x32xf32, #tpu.memory_space<vmem>>, vector<8x32xf32>
    %8 = vector.shape_cast %6 : vector<8x32xf32> to vector<1x8x32xf32>
    %cst = arith.constant dense<0.000000e+00> : vector<8x32xf32>
    %9 = vector.multi_reduction <add>, %8, %cst [0] : vector<1x8x32xf32> to vector<8x32xf32>
    %10 = arith.addf %7, %9 : vector<8x32xf32>
    %c0_6 = arith.constant 0 : index
    %c0_7 = arith.constant 0 : index
    %11 = vector.load %arg5[%c0_6, %c0_7] : memref<8x32xf32, #tpu.memory_space<vmem>>, vector<8x32xf32>
    tpu.vector_store %arg5[%c0_6, %c0_7], %10 {strides = array<i32>} : memref<8x32xf32, #tpu.memory_space<vmem>>, vector<8x32xf32>,
    %c0_i32_8 = arith.constant 0 : i32
    %12 = arith.cmpi eq, %arg1, %c0_i32_8 : i32
    %13 = arith.extui %12 : i1 to i32
    %c0_i32_9 = arith.constant 0 : i32
    %14 = arith.cmpi ne, %13, %c0_i32_9 : i32
    scf.if %14 {
      %c0_10 = arith.constant 0 : index
      %c0_11 = arith.constant 0 : index
      %15 = vector.load %arg5[%c0_10, %c0_11] : memref<8x32xf32, #tpu.memory_space<vmem>>, vector<8x32xf32>
      %cst_12 = arith.constant dense<0.000000e+00> : vector<32xf32>
      %16 = vector.multi_reduction <add>, %15, %cst_12 [0] : vector<8x32xf32> to vector<32xf32>
      %17 = vector.shape_cast %16 : vector<32xf32> to vector<1x32xf32>
      %18 = vector.shape_cast %17 : vector<1x32xf32> to vector<1x1x32xf32>
      %c0_13 = arith.constant 0 : index
      %c0_14 = arith.constant 0 : index
      %c0_15 = arith.constant 0 : index
      %19 = vector.load %arg4[%c0_13, %c0_14, %c0_15] : memref<1x1x32xf32, #tpu.memory_space<vmem>>, vector<1x1x32xf32>
      tpu.vector_store %arg4[%c0_13, %c0_14, %c0_15], %18 {strides = array<i32>} : memref<1x1x32xf32, #tpu.memory_space<vmem>>, vector<1x1x32xf32>,
    } else {
    }
    return
  }
  func.func @transform_0(%arg0: i32, %arg1: i32) -> (i32, i32) {
    %c1_i32 = arith.constant 1 : i32
    %0 = arith.muli %arg0, %c1_i32 : i32
    %1 = arith.addi %0, %arg1 : i32
    %c0_i32 = arith.constant 0 : i32
    %2 = arith.minsi %1, %c0_i32 : i32
    %c0_i32_0 = arith.constant 0 : i32
    %c0_i32_1 = arith.constant 0 : i32
    return %2, %c0_i32_0 : i32, i32
  }
  func.func @transform_1(%arg0: i32, %arg1: i32) -> (i32, i32) {
    %c1_i32 = arith.constant 1 : i32
    %0 = arith.muli %arg0, %c1_i32 : i32
    %1 = arith.addi %0, %arg1 : i32
    %c0_i32 = arith.constant 0 : i32
    %2 = arith.minsi %1, %c0_i32 : i32
    %c0_i32_0 = arith.constant 0 : i32
    %c0_i32_1 = arith.constant 0 : i32
    return %2, %c0_i32_0 : i32, i32
  }
  func.func @transform_2(%arg0: i32, %arg1: i32) -> (i32, i32, i32) {
    %c0_i32 = arith.constant 0 : i32
    %c0_i32_0 = arith.constant 0 : i32
    %c0_i32_1 = arith.constant 0 : i32
    return %arg0, %c0_i32, %c0_i32_0 : i32, i32, i32
  }
}

</mosaic_0001>

<llo_original>
// kernel: tpu_custom_call.1
$region0: #{tpu_custom_call.1}
  #allocation0 [shape = 'u32[]', space=smem, size = 0x4, offset = 0x4, fixed_abs, tag = 'smem constant byte address 0x4 - core index']
  #allocation1 [shape = 'u32[72,128]{1,0:T(1,128)}', space=vmem, size = 0x9000, scoped, tag = 'internal scratch']
  #allocation2 [shape = 'f32[8,32]{1,0:T(8,128)}', space=vmem, size = 0x1000, scoped, tag = 'scratch operand']
  %s0 = inlined_call_operand.hbm [shape: f32[8,32], index: 0, kind: input, shape index: {}]
  %s1 = inlined_call_operand.hbm [shape: f32[8,32], index: 1, kind: input, shape index: {}]
  %s2 = inlined_call_operand.hbm [shape: f32[1,1,32], index: 2, kind: output, shape index: {}]
  %s3 = sld [smem:[#allocation0]]
  $region34: #{tpu_custom_call.1} parent=0
    _
  %s5 = ssub.s32 1, %s3
  %s6 = scalar_select 0, %s5, %s3
  $region1: #{tpu_custom_call.1} parent=0
    #allocation3 [shape = 'u8[4096]{0}', space=vmem, size = 0x1000, scoped, tag = 'input window, operand 0, single buffered']
    #allocation4 [shape = 's32[1]{0}', space=sflag, size = 0x4, scoped, tag = 'scoped memory for tpu_custom_call.1']
    #allocation5 [shape = 's32[1]{0}', space=sflag, size = 0x4, scoped, tag = 'scoped memory for tpu_custom_call.1']
    #allocation6 [shape = 'u8[4096]{0}', space=vmem, size = 0x1000, scoped, tag = 'input window, operand 1, single buffered']
    #allocation7 [shape = 's32[1]{0}', space=sflag, size = 0x4, scoped, tag = 'scoped memory for tpu_custom_call.1']
    #allocation8 [shape = 'u8[512]{0}', space=vmem, size = 0x400, scoped, tag = 'output window, operand 0, single buffered']
    %7 = vsyncpa [#allocation4], 0
    %8 = vsyncpa [#allocation7], 0
    %9 = vsyncpa [#allocation5], 0
    // Predicated region
    $region2: #{tpu_custom_call.1} parent=1 // pred_check
      _
    $region3: #{tpu_custom_call.1} parent=1 // pred_check_branch
      %11 = sbr.rel (0) target = $region5
    $region4: #{tpu_custom_call.1} parent=1 // pred_region
      %s12 = sadd.s32 0, 0
      %p13 = scmp.lt.s32.totalorder %s12, 0
      %s14 = scalar_select %p13, %s12, 0
      %16 = vsyncadd [#allocation4], 0
      %s17 = smul.addr %s14, 8
      %s18 = scalar_lea.hbm %s0, %s17
      %s20 = sshll.u32 %s18, 4
      %s21 = int_to_ptr.hbm [resolvable:$true] %s20
      %s22 = sshll.u32 [#allocation3], 4
      %s23 = int_to_ptr.vmem [resolvable:$true] %s22
      %25 = dma.hbm_to_vmem [thread:$0]  %s21, 128, %s23, [#allocation4]
    $region5: #{tpu_custom_call.1} parent=1 // pred_fallthru
      _
    // Predicated region
    $region6: #{tpu_custom_call.1} parent=1 // pred_check
      _
    $region7: #{tpu_custom_call.1} parent=1 // pred_check_branch
      %27 = sbr.rel (0) target = $region9
    $region8: #{tpu_custom_call.1} parent=1 // pred_region
      %s28 = sadd.s32 0, 0
      %p29 = scmp.lt.s32.totalorder %s28, 0
      %s30 = scalar_select %p29, %s28, 0
      %32 = vsyncadd [#allocation7], 0
      %s33 = smul.addr %s30, 8
      %s34 = scalar_lea.hbm %s1, %s33
      %s36 = sshll.u32 %s34, 4
      %s37 = int_to_ptr.hbm [resolvable:$true] %s36
      %s38 = sshll.u32 [#allocation6], 4
      %s39 = int_to_ptr.vmem [resolvable:$true] %s38
      %41 = dma.hbm_to_vmem [thread:$0]  %s37, 128, %s39, [#allocation7]
    $region9: #{tpu_custom_call.1} parent=1 // pred_fallthru
      _
    // Predicated region
    $region10: #{tpu_custom_call.1} parent=1 // pred_check
      _
    $region11: #{tpu_custom_call.1} parent=1 // pred_check_branch
      %43 = sbr.rel (0) target = $region13
    $region12: #{tpu_custom_call.1} parent=1 // pred_region
      %45 = dma.done [#allocation4], 128
    $region13: #{tpu_custom_call.1} parent=1 // pred_fallthru
      _
    // Predicated region
    $region14: #{tpu_custom_call.1} parent=1 // pred_check
      _
    $region15: #{tpu_custom_call.1} parent=1 // pred_check_branch
      %47 = sbr.rel (0) target = $region17
    $region16: #{tpu_custom_call.1} parent=1 // pred_region
      %49 = dma.done [#allocation7], 128
    $region17: #{tpu_custom_call.1} parent=1 // pred_fallthru
      _
    %s50 = sadd.s32 0, 0
    %p51 = scmp.lt.s32.totalorder %s50, 0
    %s52 = scalar_select %p51, %s50, 0
    %s53 = sadd.s32 0, 0
    %p54 = scmp.lt.s32.totalorder %s53, 0
    %s55 = scalar_select %p54, %s53, 0
    %p56 = scmp.eq.s32.totalorder 0, 0
    // Predicated region
    $region18: #{tpu_custom_call.1} parent=1 // pred_check
      %p57 = pneg %p56
    $region19: #{tpu_custom_call.1} parent=1 // pred_check_branch
      %59 = sbr.rel (%p57) target = $region21
    $region20: #{tpu_custom_call.1} parent=1 // pred_region
      %vm60 = vcmask 261120
      %61 = vst.msk [vmem:[#allocation2] sm:$0xff] %vm60, 0.0
    $region21: #{tpu_custom_call.1} parent=1 // pred_fallthru
      _
    %v62 = vld [vmem:[#allocation3] sm:$0xff]
    %v63 = vld [vmem:[#allocation6] sm:$0xff]
    %v64 = vsub.f32 %v62, %v63
    %v65 = vmul.f32 %v64, %v64
    %v66 = vld [vmem:[#allocation2] sm:$0xff]
    %v67 = vadd.f32 %v65, 0.0
    %v68 = vadd.f32 %v66, %v67
    %vm69 = vcmask 261120
    %70 = vst.msk [vmem:[#allocation2] sm:$0xff] %vm69, %v68
    // Predicated region
    $region22: #{tpu_custom_call.1} parent=1 // pred_check
      %p71 = pneg %p56
    $region23: #{tpu_custom_call.1} parent=1 // pred_check_branch
      %73 = sbr.rel (%p71) target = $region25
    $region24: #{tpu_custom_call.1} parent=1 // pred_region
      %v74 = vld [vmem:[#allocation2] sm:$0xff]
      %v75 = vsel %vm69, %v74, 0.0
      %v76 = vrot.slane %v75, 4
      %v77 = vadd.f32 %v75, %v76
      %v78 = vrot.slane %v77, 2
      %v79 = vadd.f32 %v77, %v78
      %v80 = vrot.slane %v79, 1
      %v81 = vadd.f32 %v79, %v80
      %vm82 = vcmask 253952
      %83 = vst.msk [vmem:[#allocation8] sm:$0x1] %vm82, %v81
    $region25: #{tpu_custom_call.1} parent=1 // pred_fallthru
      _
    // Predicated region
    $region26: #{tpu_custom_call.1} parent=1 // pred_check
      _
    $region27: #{tpu_custom_call.1} parent=1 // pred_check_branch
      %85 = sbr.rel (0) target = $region29
    $region28: #{tpu_custom_call.1} parent=1 // pred_region
      %87 = vsyncadd [#allocation5], 0
      %s89 = sshll.u32 [#allocation8], 4
      %s90 = int_to_ptr.vmem [resolvable:$true] %s89
      %s91 = sshll.u32 %s2, 4
      %s92 = int_to_ptr.hbm [resolvable:$true] %s91
      %94 = dma.vmem_to_hbm [thread:$0]  %s90, 16, %s92, [#allocation5]
    $region29: #{tpu_custom_call.1} parent=1 // pred_fallthru
      _
    // Predicated region
    $region30: #{tpu_custom_call.1} parent=1 // pred_check
      _
    $region31: #{tpu_custom_call.1} parent=1 // pred_check_branch
      %96 = sbr.rel (0) target = $region33
    $region32: #{tpu_custom_call.1} parent=1 // pred_region
      %98 = dma.done [#allocation5], 16
    $region33: #{tpu_custom_call.1} parent=1 // pred_fallthru
      _
    %99 = vsyncpa [#allocation4], 1
    %100 = vsyncpa [#allocation7], 1
    %101 = vsyncpa [#allocation5], 1

</llo_original>
